<compile_context>
chip_gen: v6e
topology: v6e:2x2x1
jax: 0.10.0
libtpu: 0.0.40
codegen_flags: <defaults>
</compile_context>

<pallas_src>
import jax
import jax.numpy as jnp
from jax.experimental import pallas as pl
from jax.experimental.pallas import tpu as pltpu


def _default_block_b(B, S):
    """Pick a macro-batch block: 1 block at small B, >=2 multiple-of-8 blocks of
    roughly ~1024 rows per grid step at large B (v7x has 2 TCs)."""
    if B <= 16:
        return B
    rows_target = 1024
    bb = max(8, (rows_target // max(S, 1)) // 8 * 8)
    half = max(8, ((B + 1) // 2) // 8 * 8)      # ensure at least 2 blocks
    return max(8, min(bb, half))


def neural_network_with_attention(x, params, *, block_b=None,
                                  compute_dtype=jnp.bfloat16,
                                  vmem_limit_bytes=None,
                                  x_buffer_count=None):
    """x: (B, S, D) float32. params: per-layer tuple from init_params."""
    wa1, ba1, wa2, ba2, w1, b1, w2, b2 = params
    del ba2  # softmax is shift-invariant -> ba2 has zero effect on the output.
    B, S, D = x.shape
    H = wa1.shape[1]
    H2 = 2 * H
    Dp = ((D + 7) // 8) * 8            # sublane-aligned feature dim (zero padded)

    if block_b is None:
        block_b = _default_block_b(B, S)
    n_blocks = pl.cdiv(B, block_b)
    if n_blocks > 1:
        assert block_b % 8 == 0 and (block_b * S) % 8 == 0, (
            "partial batch blocks must keep sublane alignment")
    Bp = n_blocks * block_b
    rows_per_block = block_b * S

    # ---- pack parameters (in production, pre-pack once outside the hot path) ----
    # Fused first-stage weight [wa1 | w1], zero-padded on the feature (sublane) axis.
    w_fused = jnp.concatenate([wa1, w1], axis=1)                  # (D, 2H)
    if Dp > D:
        w_fused = jnp.pad(w_fused, ((0, Dp - D), (0, 0)))
    w_fused = w_fused.astype(compute_dtype)

    # f32 aux rows: [wa2^T | 0], [0 | w2^T], [ba1 | b1].
    zeros_h = jnp.zeros((1, H), jnp.float32)
    aux = jnp.concatenate([
        jnp.concatenate([wa2.T, zeros_h], axis=1),
        jnp.concatenate([zeros_h, w2.T], axis=1),
        jnp.concatenate([ba1, b1], axis=1),
    ], axis=0).astype(jnp.float32)                                # (3, 2H)

    # Flatten (B,S,D)->(B*S,Dp) in the wrapper; zero-pad batch rows / feature lanes.
    x2 = x.astype(compute_dtype).reshape(B * S, D)
    x2 = jnp.pad(x2, ((0, (Bp - B) * S), (0, Dp - D)))

    def kernel(x_ref, wf_ref, aux_ref, out_ref):
        # Single MXU pass: per-token [attention-hidden | fc1] pre-activation, f32 acc.
        xw = jnp.dot(x_ref[...], wf_ref[...],
                     preferred_element_type=jnp.float32)          # (rows, 2H)
        xw = xw + aux_ref[2, :]                                   # + [ba1 | b1] (f32)
        xw = xw.reshape(block_b, S, H2)                           # sublane-aligned split

        wa2_pad = aux_ref[0, :]                                   # (2H,) upper half 0
        w2_pad = aux_ref[1, :]                                    # (2H,) lower half 0

        # Attention scores: VPU multiply + lane reduce (no N=1 matmul; ba2 dropped).
        if H % 128 == 0:
            # Lane-tile-aligned slice: only tanh the attention half (halves EUP work).
            t = jnp.tanh(xw[..., :H])
            scores = jnp.sum(t * wa2_pad[:H], axis=-1, keepdims=True)
        else:
            t = jnp.tanh(xw)
            scores = jnp.sum(t * wa2_pad, axis=-1, keepdims=True)  # (bb, S, 1)

        # Numerically-stable softmax over seq; normalization folded into pooling.
        m = jnp.max(scores, axis=1, keepdims=True)                # (bb, 1, 1)
        e = jnp.exp(scores - m)                                   # (bb, S, 1)
        denom = jnp.sum(e, axis=1)                                # (bb, 1)

        # Attention-weighted pooling; the [H:] half is exactly fc1(attended) + b1.
        pooled = jnp.sum(e * xw, axis=1) * pl.reciprocal(denom, approx=True)
        h2 = jnp.maximum(pooled, 0.0)                             # relu, (bb, 2H)

        # fc2 (minus b2, added in the wrapper): VPU multiply + lane reduce.
        out = jnp.sum(h2 * w2_pad, axis=-1)                       # (bb,)
        # Lane-dense store: batch on the lane axis.
        out_ref[...] = out.reshape(1, 1, block_b).astype(out_ref.dtype)

    x_spec_kwargs = {}
    if x_buffer_count is not None:        # sweepable pipeline depth for the x stream
        x_spec_kwargs["pipeline_mode"] = pl.Buffered(x_buffer_count)

    cp_kwargs = dict(dimension_semantics=("parallel",))
    if vmem_limit_bytes is not None:      # raise for large blocks (scoped defaults:
        cp_kwargs["vmem_limit_bytes"] = vmem_limit_bytes  # v5e 16MiB, v6e/v7x 32MiB)

    out = pl.pallas_call(
        kernel,
        out_shape=jax.ShapeDtypeStruct((n_blocks, 1, block_b), jnp.float32),
        grid=(n_blocks,),
        in_specs=[
            pl.BlockSpec((rows_per_block, Dp), lambda i: (i, 0), **x_spec_kwargs),
            pl.BlockSpec((Dp, H2), lambda i: (0, 0)),
            pl.BlockSpec((3, H2), lambda i: (0, 0)),
        ],
        out_specs=pl.BlockSpec((1, 1, block_b), lambda i: (i, 0, 0)),
        compiler_params=pltpu.CompilerParams(**cp_kwargs),
    )(x2, w_fused, aux)

    # Lane-dense (n_blocks, 1, block_b) -> (B, 1); add b2 (folded out of the kernel).
    return out.reshape(Bp, 1)[:B] + b2


def init_params(key, input_dim, hidden_dim):
    """Deterministic PyTorch-Linear-style init. Weights stored as (fan_in, fan_out)."""
    ks = jax.random.split(key, 8)

    def lin(kw, kb, fan_in, fan_out):
        bound = 1.0 / (fan_in ** 0.5)
        w = jax.random.uniform(kw, (fan_in, fan_out), jnp.float32, -bound, bound)
        b = jax.random.uniform(kb, (1, fan_out), jnp.float32, -bound, bound)
        return w, b

    wa1, ba1 = lin(ks[0], ks[1], input_dim, hidden_dim)   # attention Linear(D,H)
    wa2, ba2 = lin(ks[2], ks[3], hidden_dim, 1)           # attention Linear(H,1)
    w1, b1 = lin(ks[4], ks[5], input_dim, hidden_dim)     # fc1
    w2, b2 = lin(ks[6], ks[7], hidden_dim, 1)             # fc2
    return (wa1, ba1, wa2, ba2, w1, b1, w2, b2)


def reference(x, params):
    wa1, ba1, wa2, ba2, w1, b1, w2, b2 = params
    scores = jnp.tanh(x @ wa1 + ba1) @ wa2 + ba2           # (B, S, 1)
    aw = jax.nn.softmax(scores, axis=1)
    attended = jnp.sum(aw * x, axis=1)                     # (B, D)
    return jnp.maximum(attended @ w1 + b1, 0.0) @ w2 + b2  # (B, 1)


if __name__ == "__main__":
    B, S, D, H = 2, 8, 16, 32                              # batch, seq, input_dim, hidden_dim
    key = jax.random.PRNGKey(0)
    kx, kp = jax.random.split(key)
    x = jax.random.normal(kx, (B, S, D), dtype=jnp.float32)
    params = init_params(kp, D, H)

    ref = reference(x, params)

    # Default (bf16 matmul operands, f32 accumulation / post-math).
    out_bf16 = jax.block_until_ready(neural_network_with_attention(x, params))
    assert out_bf16.shape == (B, 1)
    assert jnp.allclose(out_bf16, ref, atol=5e-2, rtol=5e-2), (out_bf16, ref)

    # Full f32 path (tighter check; approx reciprocal accounted for in tolerance).
    out_f32 = jax.block_until_ready(
        neural_network_with_attention(x, params, compute_dtype=jnp.float32))
    assert out_f32.shape == (B, 1)
    assert jnp.allclose(out_f32, ref, atol=1e-2, rtol=1e-2), (out_f32, ref)

    print("KERNEL_OK")
</pallas_src>

<mosaic_0001>
module attributes {stable_mosaic.version = 11 : i64} {
  func.func @kernel(%arg0: i32, %arg1: memref<16x16xbf16, #tpu.memory_space<vmem>>, %arg2: memref<16x64xbf16, #tpu.memory_space<vmem>>, %arg3: memref<3x64xf32, #tpu.memory_space<vmem>>, %arg4: memref<1x1x2xf32, #tpu.memory_space<vmem>>) attributes {dimension_semantics = [#tpu.dimension_semantics<parallel>], iteration_bounds = array<i64: 1>, scalar_prefetch = 0 : i64, scratch_operands = 0 : i64, tpu.core_type = #tpu.core_type<tc>, window_params = [{transform_indices = @transform_0, window_bounds = array<i64: 16, 16>}, {pipeline_mode = #tpu.pipeline_mode<synchronous>, transform_indices = @transform_1, window_bounds = array<i64: 16, 64>}, {pipeline_mode = #tpu.pipeline_mode<synchronous>, transform_indices = @transform_2, window_bounds = array<i64: 3, 64>}, {transform_indices = @transform_3, window_bounds = array<i64: 1, 1, 2>}]} {
    %c0 = arith.constant 0 : index
    %c0_0 = arith.constant 0 : index
    %0 = vector.load %arg1[%c0, %c0_0] : memref<16x16xbf16, #tpu.memory_space<vmem>>, vector<16x16xbf16>
    %c0_1 = arith.constant 0 : index
    %c0_2 = arith.constant 0 : index
    %1 = vector.load %arg2[%c0_1, %c0_2] : memref<16x64xbf16, #tpu.memory_space<vmem>>, vector<16x64xbf16>
    %cst = arith.constant dense<0.000000e+00> : vector<16x64xf32>
    %2 = tpu.matmul %0, %1, %cst {dimension_numbers = #tpu.dot_dimension_numbers<[1], [0], [0], [1], [0, 0, 1, 1], [], []>} : vector<16x16xbf16>, vector<16x64xbf16>, vector<16x64xf32> -> vector<16x64xf32>
    %c2 = arith.constant 2 : index
    %c0_3 = arith.constant 0 : index
    %3 = vector.load %arg3[%c2, %c0_3] : memref<3x64xf32, #tpu.memory_space<vmem>>, vector<1x64xf32>
    %4 = vector.shape_cast %3 : vector<1x64xf32> to vector<64xf32>
    %5 = vector.shape_cast %4 : vector<64xf32> to vector<1x64xf32>
    %6 = vector.broadcast %5 : vector<1x64xf32> to vector<16x64xf32>
    %7 = arith.addf %2, %6 : vector<16x64xf32>
    %8 = vector.shape_cast %7 : vector<16x64xf32> to vector<2x8x64xf32>
    %c0_4 = arith.constant 0 : index
    %c0_5 = arith.constant 0 : index
    %9 = vector.load %arg3[%c0_4, %c0_5] : memref<3x64xf32, #tpu.memory_space<vmem>>, vector<1x64xf32>
    %10 = vector.shape_cast %9 : vector<1x64xf32> to vector<64xf32>
    %c1 = arith.constant 1 : index
    %c0_6 = arith.constant 0 : index
    %11 = vector.load %arg3[%c1, %c0_6] : memref<3x64xf32, #tpu.memory_space<vmem>>, vector<1x64xf32>
    %12 = vector.shape_cast %11 : vector<1x64xf32> to vector<64xf32>
    %13 = math.tanh %8 : vector<2x8x64xf32>
    %14 = vector.shape_cast %10 : vector<64xf32> to vector<1x1x64xf32>
    %15 = vector.broadcast %14 : vector<1x1x64xf32> to vector<2x8x64xf32>
    %16 = arith.mulf %13, %15 : vector<2x8x64xf32>
    %cst_7 = arith.constant dense<0.000000e+00> : vector<2x8xf32>
    %17 = vector.multi_reduction <add>, %16, %cst_7 [2] : vector<2x8x64xf32> to vector<2x8xf32>
    %18 = vector.shape_cast %17 : vector<2x8xf32> to vector<2x8x1xf32>
    %cst_8 = arith.constant dense<0xFF800000> : vector<2x1xf32>
    %19 = vector.multi_reduction <maximumf>, %18, %cst_8 [1] : vector<2x8x1xf32> to vector<2x1xf32>
    %20 = vector.shape_cast %19 : vector<2x1xf32> to vector<2x1x1xf32>
    %21 = vector.broadcast %20 : vector<2x1x1xf32> to vector<2x8x1xf32>
    %22 = arith.subf %18, %21 : vector<2x8x1xf32>
    %23 = math.exp %22 : vector<2x8x1xf32>
    %cst_9 = arith.constant dense<0.000000e+00> : vector<2x1xf32>
    %24 = vector.multi_reduction <add>, %23, %cst_9 [1] : vector<2x8x1xf32> to vector<2x1xf32>
    %25 = vector.broadcast %23 : vector<2x8x1xf32> to vector<2x8x64xf32>
    %26 = arith.mulf %25, %8 : vector<2x8x64xf32>
    %cst_10 = arith.constant dense<0.000000e+00> : vector<2x64xf32>
    %27 = vector.multi_reduction <add>, %26, %cst_10 [1] : vector<2x8x64xf32> to vector<2x64xf32>
    %28 = tpu.reciprocal %24 {approx = true} : vector<2x1xf32> -> vector<2x1xf32>
    %29 = vector.broadcast %28 : vector<2x1xf32> to vector<2x64xf32>
    %30 = arith.mulf %27, %29 : vector<2x64xf32>
    %cst_11 = arith.constant 0.000000e+00 : f32
    %31 = vector.broadcast %cst_11 : f32 to vector<2x64xf32>
    %32 = arith.maximumf %30, %31 : vector<2x64xf32>
    %33 = vector.shape_cast %12 : vector<64xf32> to vector<1x64xf32>
    %34 = vector.broadcast %33 : vector<1x64xf32> to vector<2x64xf32>
    %35 = arith.mulf %32, %34 : vector<2x64xf32>
    %cst_12 = arith.constant dense<0.000000e+00> : vector<2xf32>
    %36 = vector.multi_reduction <add>, %35, %cst_12 [1] : vector<2x64xf32> to vector<2xf32>
    %37 = vector.shape_cast %36 : vector<2xf32> to vector<1x1x2xf32>
    %c0_13 = arith.constant 0 : index
    %c0_14 = arith.constant 0 : index
    %c0_15 = arith.constant 0 : index
    %38 = vector.load %arg4[%c0_13, %c0_14, %c0_15] : memref<1x1x2xf32, #tpu.memory_space<vmem>>, vector<1x1x2xf32>
    tpu.vector_store %arg4[%c0_13, %c0_14, %c0_15], %37 {strides = array<i32>} : memref<1x1x2xf32, #tpu.memory_space<vmem>>, vector<1x1x2xf32>,
    return
  }
  func.func @transform_0(%arg0: i32) -> (i32, i32) {
    %c0_i32 = arith.constant 0 : i32
    %c0_i32_0 = arith.constant 0 : i32
    return %arg0, %c0_i32 : i32, i32
  }
  func.func @transform_1(%arg0: i32) -> (i32, i32) {
    %c0_i32 = arith.constant 0 : i32
    %c0_i32_0 = arith.constant 0 : i32
    %c0_i32_1 = arith.constant 0 : i32
    return %c0_i32, %c0_i32_0 : i32, i32
  }
  func.func @transform_2(%arg0: i32) -> (i32, i32) {
    %c0_i32 = arith.constant 0 : i32
    %c0_i32_0 = arith.constant 0 : i32
    %c0_i32_1 = arith.constant 0 : i32
    return %c0_i32, %c0_i32_0 : i32, i32
  }
  func.func @transform_3(%arg0: i32) -> (i32, i32, i32) {
    %c0_i32 = arith.constant 0 : i32
    %c0_i32_0 = arith.constant 0 : i32
    %c0_i32_1 = arith.constant 0 : i32
    return %arg0, %c0_i32, %c0_i32_0 : i32, i32, i32
  }
}

</mosaic_0001>

<llo_original>
// kernel: tpu_custom_call.1
$region0: #{tpu_custom_call.1}
  #allocation0 [shape = 'u32[]', space=smem, size = 0x4, offset = 0x4, fixed_abs, tag = 'smem constant byte address 0x4 - core index']
  #allocation1 [shape = 'u32[144,128]{1,0:T(1,128)}', space=vmem, size = 0x12000, scoped, tag = 'internal scratch']
  %s0 = inlined_call_operand.hbm [shape: bf16[16,16], index: 0, kind: input, shape index: {}]
  %s1 = inlined_call_operand.hbm [shape: bf16[16,64], index: 1, kind: input, shape index: {}]
  %s2 = inlined_call_operand.hbm [shape: f32[3,64], index: 2, kind: input, shape index: {}]
  %s3 = inlined_call_operand.hbm [shape: f32[1,1,2], index: 3, kind: output, shape index: {}]
  %s4 = sld [smem:[#allocation0]]
  $region34: #{tpu_custom_call.1} parent=0
    _
  %s6 = ssub.s32 1, %s4
  %s7 = scalar_select 0, %s6, %s4
  $region1: #{tpu_custom_call.1} parent=0
    #allocation2 [shape = 'u8[4096]{0}', space=vmem, size = 0x1000, scoped, tag = 'input window, operand 0, single buffered']
    #allocation3 [shape = 's32[1]{0}', space=sflag, size = 0x4, scoped, tag = 'scoped memory for tpu_custom_call.1']
    #allocation4 [shape = 's32[1]{0}', space=sflag, size = 0x4, scoped, tag = 'scoped memory for tpu_custom_call.1']
    #allocation5 [shape = 'u8[4096]{0}', space=vmem, size = 0x1000, scoped, tag = 'input window, operand 1, single buffered']
    #allocation6 [shape = 's32[1]{0}', space=sflag, size = 0x4, scoped, tag = 'scoped memory for tpu_custom_call.1']
    #allocation7 [shape = 'u8[2048]{0}', space=vmem, size = 0x800, scoped, tag = 'input window, operand 2, single buffered']
    #allocation8 [shape = 'u8[512]{0}', space=vmem, size = 0x400, scoped, tag = 'output window, operand 0, single buffered']
    %8 = vsyncpa [#allocation3], 0
    %9 = vsyncpa [#allocation6], 0
    %10 = vsyncpa [#allocation4], 0
    // Predicated region
    $region2: #{tpu_custom_call.1} parent=1 // pred_check
      _
    $region3: #{tpu_custom_call.1} parent=1 // pred_check_branch
      %12 = sbr.rel (0) target = $region5
    $region4: #{tpu_custom_call.1} parent=1 // pred_region
      %s14 = ssub.s32 128, 128
      %15 = vsyncadd [#allocation3], %s14
      %s16 = sshll.u32 [#allocation2], 4
      %s17 = int_to_ptr.vmem [resolvable:$true] %s16
      %22 = dma.hbm_to_vmem [thread:$0]  %s0, 128, %s17, [#allocation3], 64, 64, 4
    $region5: #{tpu_custom_call.1} parent=1 // pred_fallthru
      _
    // Predicated region
    $region6: #{tpu_custom_call.1} parent=1 // pred_check
      _
    $region7: #{tpu_custom_call.1} parent=1 // pred_check_branch
      %24 = sbr.rel (0) target = $region9
    $region8: #{tpu_custom_call.1} parent=1 // pred_region
      %s26 = ssub.s32 128, 128
      %27 = vsyncadd [#allocation6], %s26
      %s28 = sshll.u32 [#allocation5], 4
      %s29 = int_to_ptr.vmem [resolvable:$true] %s28
      %34 = dma.hbm_to_vmem [thread:$0]  %s1, 128, %s29, [#allocation6], 64, 64, 4
    $region9: #{tpu_custom_call.1} parent=1 // pred_fallthru
      _
    // Predicated region
    $region10: #{tpu_custom_call.1} parent=1 // pred_check
      _
    $region11: #{tpu_custom_call.1} parent=1 // pred_check_branch
      %36 = sbr.rel (0) target = $region13
    $region12: #{tpu_custom_call.1} parent=1 // pred_region
      %s38 = ssub.s32 64, 64
      %39 = vsyncadd [#allocation6], %s38
      %s41 = sshll.u32 [#allocation7], 4
      %s42 = int_to_ptr.vmem [resolvable:$true] %s41
      %44 = dma.hbm_to_vmem [thread:$0]  %s2, 64, %s42, [#allocation6]
    $region13: #{tpu_custom_call.1} parent=1 // pred_fallthru
      _
    // Predicated region
    $region14: #{tpu_custom_call.1} parent=1 // pred_check
      _
    $region15: #{tpu_custom_call.1} parent=1 // pred_check_branch
      %46 = sbr.rel (0) target = $region17
    $region16: #{tpu_custom_call.1} parent=1 // pred_region
      %47 = dma.done [#allocation3], 128
    $region17: #{tpu_custom_call.1} parent=1 // pred_fallthru
      _
    // Predicated region
    $region18: #{tpu_custom_call.1} parent=1 // pred_check
      _
    $region19: #{tpu_custom_call.1} parent=1 // pred_check_branch
      %49 = sbr.rel (0) target = $region21
    $region20: #{tpu_custom_call.1} parent=1 // pred_region
      %50 = dma.done [#allocation6], 128
    $region21: #{tpu_custom_call.1} parent=1 // pred_fallthru
      _
    // Predicated region
    $region22: #{tpu_custom_call.1} parent=1 // pred_check
      _
    $region23: #{tpu_custom_call.1} parent=1 // pred_check_branch
      %52 = sbr.rel (0) target = $region25
    $region24: #{tpu_custom_call.1} parent=1 // pred_region
      %53 = dma.done [#allocation6], 64
    $region25: #{tpu_custom_call.1} parent=1 // pred_fallthru
      _
    %v55 = vld [vmem:[#allocation2] sm:$0xf]
    %v56 = vld [vmem:[#allocation2 + $0x4] sm:$0xf]
    %v57 = vld [vmem:[#allocation5] sm:$0xf]
    %v58 = vld [vmem:[#allocation5 + $0x4] sm:$0xf]
    %v59 = vld [vmem:[#allocation7 + $0x2] sm:$0x1]
    %v60 = vlaneseq
    %v61 = vshrl.u32 %v60, 7
    %v62 = vsub.s32 0, %v61
    %v63 = vrot.slane %v59, %v62
    %v66 = vunpack.c.l.b16 %v55
    %v67 = vunpack.c.l.b16 %v56
    %v68 = vpack.c.b16 %v67, %v66
    %v71 = vunpack.c.l.b16 %v57
    %v72 = vunpack.c.l.b16 %v58
    %v73 = vpack.c.b16 %v72, %v71
    %vm75 = vcmask 130048
    %v77 = vsel %vm75, %v68, 0
    %79 = vmatprep.subr.bf16.mxu0 0
    %80 = vmatpush1.bf16.msra.mxu0 0
    %81 = vmatprep.subr.bf16.mxu0 0
    %82 = vmatpush1.bf16.msra.mxu0 0
    %83 = vmatprep.subr.bf16.mxu0 0
    %84 = vmatpush1.bf16.msra.mxu0 0
    %85 = vmatprep.subr.bf16.mxu0 0
    %86 = vmatpush1.bf16.msra.mxu0 0
    %87 = vmatprep.subr.bf16.mxu0 0
    %88 = vmatpush1.bf16.msra.mxu0 0
    %89 = vmatprep.subr.bf16.mxu0 0
    %90 = vmatpush1.bf16.msra.mxu0 0
    %91 = vmatprep.subr.bf16.mxu0 0
    %92 = vmatpush1.bf16.msra.mxu0 0
    %93 = vmatprep.subr.bf16.mxu0 0
    %94 = vmatpush1.bf16.msra.mxu0 %v73
    %95 = vmatprep.subr.bf16.mxu0 0
    %96 = vmatpush2.bf16.msra.mxu0 0
    %97 = vmatprep.subr.bf16.mxu0 0
    %98 = vmatpush2.bf16.msra.mxu0 0
    %99 = vmatprep.subr.bf16.mxu0 0
    %100 = vmatpush2.bf16.msra.mxu0 0
    %101 = vmatprep.subr.bf16.mxu0 0
    %102 = vmatpush2.bf16.msra.mxu0 0
    %103 = vmatprep.subr.bf16.mxu0 0
    %104 = vmatpush2.bf16.msra.mxu0 0
    %105 = vmatprep.subr.bf16.mxu0 0
    %106 = vmatpush2.bf16.msra.mxu0 0
    %107 = vmatprep.subr.bf16.mxu0 0
    %108 = vmatpush2.bf16.msra.mxu0 0
    %109 = vmatprep.subr.bf16.mxu0 0
    %110 = vmatpush2.bf16.msra.mxu0 0
    %111 = vmatprep.mubr.bf16.mxu0 0
    %112 = vmatmul.mubr.bf16.gmra.mxu0 %v77
    %v113 = vpop.f32.mrf.mxu0
    %v114 = vadd.f32 %v63, %v113
    %v115 = vpop.f32.mrf.mxu0
    %v116 = vpop.f32.mrf.mxu0
    %v117 = vadd.f32 %v63, %v116
    %v118 = vpop.f32.mrf.mxu0
    %119 = vdwg.mxu0
    %v120 = vld [vmem:[#allocation7] sm:$0x1]
    %v121 = vld [vmem:[#allocation7 + $0x1] sm:$0x1]
    %v122 = vtanh.pop %v114
    %v123 = vtanh.pop %v117
    %v124 = vlaneseq
    %v125 = vshrl.u32 %v124, 7
    %v126 = vsub.s32 0, %v125
    %v127 = vrot.slane %v120, %v126
    %v128 = vmul.f32 %v122, %v127
    %v129 = vmul.f32 %v123, %v127
    %vm130 = vcmask 523264
    %v131 = vsel %vm130, %v128, 0.0
    %132 = vadd.xlane.f32.xlu0 %v131
    %v133 = vpop.xlane.xlu0 %132
    %v134 = vsel %vm130, %v129, 0.0
    %135 = vadd.xlane.f32.xlu0 %v134
    %v136 = vpop.xlane.xlu0 %135
    %v137 = vrot.slane %v133, 4
    %v138 = vmax.f32 %v133, %v137
    %v139 = vrot.slane %v138, 2
    %v140 = vmax.f32 %v138, %v139
    %v141 = vrot.slane %v140, 1
    %v142 = vmax.f32 %v140, %v141
    %v143 = vrot.slane %v136, 4
    %v144 = vmax.f32 %v136, %v143
    %v145 = vrot.slane %v144, 2
    %v146 = vmax.f32 %v144, %v145
    %v147 = vrot.slane %v146, 1
    %v148 = vmax.f32 %v146, %v147
    %v149 = vsub.f32 %v133, %v142
    %v150 = vsub.f32 %v136, %v148
    %v151 = vmul.f32 %v149, 1.442695
    %v152 = vpow.pop %v151
    %v153 = vmul.f32 %v150, 1.442695
    %v154 = vpow.pop %v153
    %v155 = vrot.slane %v152, 4
    %v156 = vadd.f32 %v152, %v155
    %v157 = vrot.slane %v156, 2
    %v158 = vadd.f32 %v156, %v157
    %v159 = vrot.slane %v158, 1
    %v160 = vadd.f32 %v158, %v159
    %v161 = vrot.slane %v154, 4
    %v162 = vadd.f32 %v154, %v161
    %v163 = vrot.slane %v162, 2
    %v164 = vadd.f32 %v162, %v163
    %v165 = vrot.slane %v164, 1
    %v166 = vadd.f32 %v164, %v165
    %v167 = vmul.f32 %v152, %v114
    %v168 = vmul.f32 %v154, %v117
    %v169 = vsel %vm130, %v167, 0.0
    %v170 = vrot.slane %v169, 4
    %v171 = vadd.f32 %v169, %v170
    %v172 = vrot.slane %v171, 2
    %v173 = vadd.f32 %v171, %v172
    %v174 = vrot.slane %v173, 1
    %v175 = vadd.f32 %v173, %v174
    %v176 = vsel %vm130, %v168, 0.0
    %v177 = vrot.slane %v176, 4
    %v178 = vadd.f32 %v176, %v177
    %v179 = vrot.slane %v178, 2
    %v180 = vadd.f32 %v178, %v179
    %v181 = vrot.slane %v180, 1
    %v182 = vadd.f32 %v180, %v181
    %v183 = vrcp.pop %v160
    %v184 = vrcp.pop %v166
    %v185 = vmul.f32 %v175, %v183
    %v186 = vmul.f32 %v182, %v184
    %v187 = vmax.f32 %v185, 0.0
    %v188 = vmax.f32 %v186, 0.0
    %v189 = vlaneseq
    %v190 = vshrl.u32 %v189, 7
    %v191 = vsub.s32 0, %v190
    %v192 = vrot.slane %v121, %v191
    %v193 = vmul.f32 %v187, %v192
    %v194 = vmul.f32 %v188, %v192
    %v197 = vrot.slane %v194, 7
    %vm198 = vcmask 1041409
    %v199 = vsel %vm198, %v197, %v193
    %vm201 = vcmask 517120
    %v202 = vsel %vm201, %v199, 0.0
    %203 = vadd.xlane.f32.xlu0 %v202
    %v204 = vpop.xlane.xlu0 %203
    %v206 = vlaneseq
    %v207 = vand.u32 %v206, 127
    %v208 = vlaneseq
    %v209 = vshrl.u32 %v208, 7
    %v210 = vsub.s32 %v207, %v209
    %v211 = vrot.slane %v204, %v210
    %vm213 = vcmask 8192
    %214 = vst.msk [vmem:[#allocation8] sm:$0x1] %vm213, %v211
    // Predicated region
    $region26: #{tpu_custom_call.1} parent=1 // pred_check
      _
    $region27: #{tpu_custom_call.1} parent=1 // pred_check_branch
      %216 = sbr.rel (0) target = $region29
    $region28: #{tpu_custom_call.1} parent=1 // pred_region
      %s218 = ssub.s32 16, 16
      %219 = vsyncadd [#allocation4], %s218
      %s221 = sshll.u32 [#allocation8], 4
      %s222 = int_to_ptr.vmem [resolvable:$true] %s221
      %224 = dma.vmem_to_hbm [thread:$0]  %s222, 16, %s3, [#allocation4]
    $region29: #{tpu_custom_call.1} parent=1 // pred_fallthru
      _
    // Predicated region
    $region30: #{tpu_custom_call.1} parent=1 // pred_check
      _
    $region31: #{tpu_custom_call.1} parent=1 // pred_check_branch
      %226 = sbr.rel (0) target = $region33
    $region32: #{tpu_custom_call.1} parent=1 // pred_region
      %227 = dma.done [#allocation4], 16
    $region33: #{tpu_custom_call.1} parent=1 // pred_fallthru
      _
    %228 = vsyncpa [#allocation3], 1
    %229 = vsyncpa [#allocation6], 1
    %230 = vsyncpa [#allocation4], 1

</llo_original>
